<compile_context>
chip_gen: v5e
topology: v5e:2x2
jax: 0.10.0
libtpu: 0.0.40
codegen_flags: <defaults>
</compile_context>

<pallas_src>
import functools
import math

import jax
import jax.numpy as jnp
from jax import lax
from jax.experimental import pallas as pl
from jax.experimental.pallas import tpu as pltpu


# ----------------------------- helpers -------------------------------------


def _round_up(n, m):
    return ((n + m - 1) // m) * m


def _row_tile(rows):
    """Row-tile for the flattened (B*S_pad) token grid.

    rows is a multiple of 8.  Prefer the largest tile <= 512 that still yields
    >= 2 grid steps (so both v7x TensorCores get work)."""
    for t in (512, 256, 128, 64, 32, 16, 8):
        if rows % t == 0 and rows // t >= 2:
            return t
    return rows


def _ff_chunk(d_ff):
    """Chunk of d_ff kept live inside the FFN kernel."""
    if d_ff <= 512:
        return d_ff
    for c in (512, 256, 128):
        if d_ff % c == 0:
            return c
    return d_ff


@functools.lru_cache(maxsize=None)
def _vmem_limit_bytes():
    try:
        info = pltpu.get_tpu_info()
        cap = getattr(info, "vmem_capacity_bytes", None)
        if not cap:
            cap = 64 * 1024 * 1024
    except Exception:  # pragma: no cover - conservative fallback
        cap = 64 * 1024 * 1024
    # ~3/4 of physical VMEM, capped at 96 MiB (v6e/v5e have 128 MiB, v7x 64 MiB).
    return int(min(96 * 1024 * 1024, (cap * 3) // 4))


def _cparams():
    return pltpu.CompilerParams(
        dimension_semantics=("parallel",),
        vmem_limit_bytes=_vmem_limit_bytes(),
    )


@functools.lru_cache(maxsize=None)
def _single_buffering_supported():
    """Probe whether pipeline_mode=pl.Buffered(1) works on this jax install."""
    def _k(x_ref, w_ref, o_ref):
        o_ref[...] = x_ref[...] + w_ref[...]

    try:
        x = jnp.zeros((16, 128), jnp.float32)
        w = jnp.zeros((1, 128), jnp.float32)
        out = pl.pallas_call(
            _k,
            out_shape=jax.ShapeDtypeStruct((16, 128), jnp.float32),
            grid=(2,),
            in_specs=[
                pl.BlockSpec((8, 128), lambda i: (i, 0)),
                pl.BlockSpec((1, 128), lambda i: (0, 0),
                             pipeline_mode=pl.Buffered(1)),
            ],
            out_specs=pl.BlockSpec((8, 128), lambda i: (i, 0)),
        )(x, w)
        jax.block_until_ready(out)
        return True
    except Exception:
        return False


def _inv_spec(shape):
    """BlockSpec for a grid-invariant operand (weights / bias / LN params).

    Single-buffered (pl.Buffered(1)) when supported: the block never changes
    across the row grid, so double-buffering it only wastes VMEM."""
    nd = len(shape)
    imap = lambda i: (0,) * nd
    if _single_buffering_supported():
        return pl.BlockSpec(shape, imap, pipeline_mode=pl.Buffered(1))
    return pl.BlockSpec(shape, imap)


# ----------------------------- kernels -------------------------------------


def _dense_kernel(x_ref, w_ref, b_ref, o_ref, *, scale):
    """out = (x @ w + b) * scale ; bf16 MXU operands, f32 accumulate."""
    x = x_ref[...].astype(jnp.bfloat16)
    y = jnp.dot(x, w_ref[...], preferred_element_type=jnp.float32)
    y = y + b_ref[...].astype(jnp.float32)
    if scale != 1.0:
        y = y * jnp.float32(scale)
    o_ref[...] = y.astype(o_ref.dtype)


def _proj_add_ln_kernel(x_ref, res_ref, w_ref, b_ref, g_ref, be_ref, o_ref, *, eps):
    """out = LayerNorm(res + x @ w + b) ; fused matmul epilogue."""
    y = jnp.dot(x_ref[...].astype(jnp.bfloat16), w_ref[...],
                preferred_element_type=jnp.float32)
    y = y + b_ref[...].astype(jnp.float32) + res_ref[...].astype(jnp.float32)
    mu = jnp.mean(y, axis=-1, keepdims=True)
    var = jnp.mean(jnp.square(y - mu), axis=-1, keepdims=True)
    yn = (y - mu) * lax.rsqrt(var + jnp.float32(eps))
    o_ref[...] = (yn * g_ref[...].astype(jnp.float32)
                  + be_ref[...].astype(jnp.float32)).astype(o_ref.dtype)


def _ffn_add_ln_kernel(x_ref, w1_ref, b1_ref, w2_ref, b2_ref, g_ref, be_ref,
                       o_ref, *, eps, ff_chunk):
    """out = LayerNorm(x + Linear(ReLU(Linear(x)))) ; d_ff processed in chunks."""
    x32 = x_ref[...].astype(jnp.float32)
    xb = x32.astype(jnp.bfloat16)
    d_ff = w1_ref.shape[1]
    d_out = w2_ref.shape[1]
    acc = jnp.zeros((x32.shape[0], d_out), jnp.float32)
    # Static chunk loop (small trip count) keeps the live (rows, d_ff) ReLU
    # intermediate bounded at (rows, ff_chunk).
    for c in range(d_ff // ff_chunk):
        sl = slice(c * ff_chunk, (c + 1) * ff_chunk)
        h = jnp.dot(xb, w1_ref[:, sl], preferred_element_type=jnp.float32)
        h = jnp.maximum(h + b1_ref[:, sl].astype(jnp.float32), 0.0)
        acc = acc + jnp.dot(h.astype(jnp.bfloat16), w2_ref[sl, :],
                            preferred_element_type=jnp.float32)
    y = acc + b2_ref[...].astype(jnp.float32) + x32
    mu = jnp.mean(y, axis=-1, keepdims=True)
    var = jnp.mean(jnp.square(y - mu), axis=-1, keepdims=True)
    yn = (y - mu) * lax.rsqrt(var + jnp.float32(eps))
    o_ref[...] = (yn * g_ref[...].astype(jnp.float32)
                  + be_ref[...].astype(jnp.float32)).astype(o_ref.dtype)


def _attn_kernel(qkv_ref, *rest, num_heads, scale, clip, use_mask):
    """All heads of one batch: logits -> (clip) -> mask -> softmax -> @V."""
    o_ref = rest[-1]
    qkv = qkv_ref[0]                                   # (S, 3*d_model), bf16
    d_model = qkv.shape[-1] // 3
    depth = d_model // num_heads
    q = qkv[:, :d_model].astype(jnp.bfloat16)
    k = qkv[:, d_model:2 * d_model].astype(jnp.bfloat16)
    v = qkv[:, 2 * d_model:].astype(jnp.bfloat16)

    bias = None
    if use_mask:
        # (1, S) additive key mask, loaded once per batch (not per head).
        bias = rest[0][...].astype(jnp.float32) * jnp.float32(-1000000000.0)

    heads = []
    for h in range(num_heads):
        sl = slice(h * depth, (h + 1) * depth)
        # Contract the depth axes directly -- no explicit K transpose.
        logits = lax.dot_general(q[:, sl], k[:, sl], (((1,), (1,)), ((), ())),
                                 preferred_element_type=jnp.float32)
        logits = logits * jnp.float32(scale)
        if clip is not None:
            logits = jnp.float32(clip) * jnp.tanh(logits)
        if use_mask:
            logits = logits + bias
        m = jnp.max(logits, axis=-1, keepdims=True)
        e = jnp.exp(logits - m)
        p = e * pl.reciprocal(jnp.sum(e, axis=-1, keepdims=True), approx=True)
        heads.append(jnp.dot(p.astype(jnp.bfloat16), v[:, sl],
                             preferred_element_type=jnp.float32))
    # Lane-dense (S, d_model) store of the concatenated heads.
    o_ref[0] = jnp.concatenate(heads, axis=-1).astype(o_ref.dtype)


# ----------------------------- pallas wrappers ------------------------------


def dense(x2, w_bf16, b, *, scale=1.0, out_dtype=None):
    """(rows, d_in) @ (d_in, d_out) + b, optionally scaled.  w_bf16 is bf16."""
    rows, d_in = x2.shape
    d_out = w_bf16.shape[1]
    out_dtype = x2.dtype if out_dtype is None else out_dtype
    tr = _row_tile(rows)
    return pl.pallas_call(
        functools.partial(_dense_kernel, scale=float(scale)),
        out_shape=jax.ShapeDtypeStruct((rows, d_out), out_dtype),
        grid_spec=pltpu.PrefetchScalarGridSpec(
            num_scalar_prefetch=0,
            grid=(rows // tr,),
            in_specs=[
                pl.BlockSpec((tr, d_in), lambda i: (i, 0)),
                _inv_spec((d_in, d_out)),
                _inv_spec((1, d_out)),
            ],
            out_specs=pl.BlockSpec((tr, d_out), lambda i: (i, 0)),
        ),
        compiler_params=_cparams(),
        cost_estimate=pl.CostEstimate(
            flops=2 * rows * d_in * d_out,
            transcendentals=0,
            bytes_accessed=4 * rows * d_in + 2 * d_in * d_out
            + jnp.dtype(out_dtype).itemsize * rows * d_out),
    )(x2, w_bf16, b.reshape(1, d_out))


def proj_add_ln(x2, res2, w_bf16, b, gamma, beta, eps=1e-6):
    """LayerNorm(res2 + x2 @ w + b) ; fused output-projection epilogue."""
    rows, d_in = x2.shape
    d_out = w_bf16.shape[1]
    tr = _row_tile(rows)
    return pl.pallas_call(
        functools.partial(_proj_add_ln_kernel, eps=float(eps)),
        out_shape=jax.ShapeDtypeStruct((rows, d_out), res2.dtype),
        grid_spec=pltpu.PrefetchScalarGridSpec(
            num_scalar_prefetch=0,
            grid=(rows // tr,),
            in_specs=[
                pl.BlockSpec((tr, d_in), lambda i: (i, 0)),
                pl.BlockSpec((tr, d_out), lambda i: (i, 0)),
                _inv_spec((d_in, d_out)),
                _inv_spec((1, d_out)),
                _inv_spec((1, d_out)),
                _inv_spec((1, d_out)),
            ],
            out_specs=pl.BlockSpec((tr, d_out), lambda i: (i, 0)),
        ),
        compiler_params=_cparams(),
        cost_estimate=pl.CostEstimate(
            flops=2 * rows * d_in * d_out + 8 * rows * d_out,
            transcendentals=rows,
            bytes_accessed=2 * rows * d_in + 2 * d_in * d_out
            + 8 * rows * d_out),
    )(x2, res2, w_bf16, b.reshape(1, d_out), gamma.reshape(1, d_out),
      beta.reshape(1, d_out))


def ffn_add_ln(x2, w1_bf16, b1, w2_bf16, b2, gamma, beta, eps=1e-6):
    """LayerNorm(x2 + Linear(ReLU(Linear(x2)))) ; fully fused FFN block."""
    rows, d_model = x2.shape
    d_ff = w1_bf16.shape[1]
    tr = _row_tile(rows)
    return pl.pallas_call(
        functools.partial(_ffn_add_ln_kernel, eps=float(eps),
                          ff_chunk=_ff_chunk(d_ff)),
        out_shape=jax.ShapeDtypeStruct((rows, d_model), x2.dtype),
        grid_spec=pltpu.PrefetchScalarGridSpec(
            num_scalar_prefetch=0,
            grid=(rows // tr,),
            in_specs=[
                pl.BlockSpec((tr, d_model), lambda i: (i, 0)),
                _inv_spec((d_model, d_ff)),
                _inv_spec((1, d_ff)),
                _inv_spec((d_ff, d_model)),
                _inv_spec((1, d_model)),
                _inv_spec((1, d_model)),
                _inv_spec((1, d_model)),
            ],
            out_specs=pl.BlockSpec((tr, d_model), lambda i: (i, 0)),
        ),
        compiler_params=_cparams(),
        cost_estimate=pl.CostEstimate(
            flops=4 * rows * d_model * d_ff + 8 * rows * d_model,
            transcendentals=rows,
            bytes_accessed=8 * rows * d_model + 4 * d_model * d_ff),
    )(x2, w1_bf16, b1.reshape(1, d_ff), w2_bf16, b2.reshape(1, d_model),
      gamma.reshape(1, d_model), beta.reshape(1, d_model))


def attention_core(qkv, *, num_heads, key_mask=None, temp=1.0, clip=None):
    """Fused multi-head attention for all heads of each batch.

    qkv: (B, S, 3*d_model) (fused Q|K|V).  key_mask: optional (B, S) additive
    padding mask (1.0 = masked).  Returns (B, S, d_model)."""
    B, S, three_d = qkv.shape
    d_model = three_d // 3
    depth = d_model // num_heads
    scale = 1.0 / (math.sqrt(depth) * float(temp))
    use_mask = key_mask is not None

    in_specs = [pl.BlockSpec((1, S, three_d), lambda b: (b, 0, 0))]
    args = (qkv,)
    if use_mask:
        in_specs.append(pl.BlockSpec((1, S), lambda b: (b, 0)))
        args = args + (key_mask,)

    kernel = functools.partial(
        _attn_kernel, num_heads=num_heads, scale=scale,
        clip=None if clip is None else float(clip), use_mask=use_mask)

    return pl.pallas_call(
        kernel,
        out_shape=jax.ShapeDtypeStruct((B, S, d_model), qkv.dtype),
        grid_spec=pltpu.PrefetchScalarGridSpec(
            num_scalar_prefetch=0,
            grid=(B,),
            in_specs=in_specs,
            out_specs=pl.BlockSpec((1, S, d_model), lambda b: (b, 0, 0)),
        ),
        compiler_params=_cparams(),
        cost_estimate=pl.CostEstimate(
            flops=4 * B * num_heads * S * S * depth,
            transcendentals=B * num_heads * S * S,
            bytes_accessed=2 * B * S * (three_d + d_model) + 4 * B * S),
    )(*args)


# ----------------------------- model ---------------------------------------


def transformer_encoder(params, x, mask=None, *, num_heads):
    """Forward pass of TransformerEncoder (dropout = identity, eval mode).

    x: (B, S, d_x).  mask: optional (B, 1, 1, S) padding mask (torch broadcast).
    """
    B, S, d_x = x.shape
    d_model = params["in_w"].shape[1]
    assert d_model % num_heads == 0

    # Pad the sequence ONCE; all activations stay (B*S_pad, d) across layers.
    S_pad = _round_up(S, 8)
    if S_pad != S:
        x = jnp.pad(x, ((0, 0), (0, S_pad - S), (0, 0)))
    rows = B * S_pad

    key_mask = None
    if mask is not None:
        key_mask = mask.reshape(B, S).astype(jnp.float32)
        if S_pad != S:
            key_mask = jnp.pad(key_mask, ((0, 0), (0, S_pad - S)),
                               constant_values=1.0)
    elif S_pad != S:
        key_mask = jnp.pad(jnp.zeros((B, S), jnp.float32),
                           ((0, 0), (0, S_pad - S)), constant_values=1.0)

    x2 = x.reshape(rows, d_x)
    net = dense(x2, params["in_w"].astype(jnp.bfloat16), params["in_b"],
                scale=math.sqrt(d_model))                       # f32 residual stream

    for lp in params["layers"]:
        # Fused QKV projection: one read of `net`, one wide lane-dense output.
        w_qkv = jnp.concatenate(
            [lp["wq_w"], lp["wk_w"], lp["wv_w"]], axis=1).astype(jnp.bfloat16)
        b_qkv = jnp.concatenate([lp["wq_b"], lp["wk_b"], lp["wv_b"]], axis=0)
        qkv = dense(net, w_qkv, b_qkv, out_dtype=jnp.bfloat16)   # (rows, 3*d_model)

        ctx = attention_core(qkv.reshape(B, S_pad, 3 * d_model),
                             num_heads=num_heads, key_mask=key_mask)
        ctx2 = ctx.reshape(rows, d_model)                        # bf16, matmul-only

        # Wo projection + residual + LayerNorm fused.
        out1 = proj_add_ln(ctx2, net, lp["wo_w"].astype(jnp.bfloat16),
                           lp["wo_b"], lp["ln1_g"], lp["ln1_b"])
        # FFN (Linear-ReLU-Linear) + residual + LayerNorm fused.
        net = ffn_add_ln(out1, lp["ff1_w"].astype(jnp.bfloat16), lp["ff1_b"],
                         lp["ff2_w"].astype(jnp.bfloat16), lp["ff2_b"],
                         lp["ln2_g"], lp["ln2_b"])

    out = net.reshape(B, S_pad, d_model)
    if S_pad != S:
        out = out[:, :S, :]
    return out


# ----------------------------- params & reference ---------------------------


def _init_linear(key, d_in, d_out):
    k1, k2 = jax.random.split(key)
    lim = 1.0 / math.sqrt(d_in)
    w = jax.random.uniform(k1, (d_in, d_out), minval=-lim, maxval=lim,
                           dtype=jnp.float32)
    b = jax.random.uniform(k2, (d_out,), minval=-lim, maxval=lim,
                           dtype=jnp.float32)
    return w, b


def init_params(key, d_x, d_model, num_heads, d_ff, num_layers):
    assert d_model % num_heads == 0
    params = {}
    key, sub = jax.random.split(key)
    params["in_w"], params["in_b"] = _init_linear(sub, d_x, d_model)
    params["layers"] = []
    for _ in range(num_layers):
        lp = {}
        for name, din, dout in [("wq", d_model, d_model), ("wk", d_model, d_model),
                                ("wv", d_model, d_model), ("wo", d_model, d_model),
                                ("ff1", d_model, d_ff), ("ff2", d_ff, d_model)]:
            key, sub = jax.random.split(key)
            lp[name + "_w"], lp[name + "_b"] = _init_linear(sub, din, dout)
        lp["ln1_g"] = jnp.ones((d_model,), jnp.float32)
        lp["ln1_b"] = jnp.zeros((d_model,), jnp.float32)
        lp["ln2_g"] = jnp.ones((d_model,), jnp.float32)
        lp["ln2_b"] = jnp.zeros((d_model,), jnp.float32)
        params["layers"].append(lp)
    return params


def _ln_ref(z, g, b, eps=1e-6):
    mu = z.mean(-1, keepdims=True)
    var = ((z - mu) ** 2).mean(-1, keepdims=True)
    return (z - mu) / jnp.sqrt(var + eps) * g + b


def reference_encoder(params, x, mask=None, *, num_heads):
    B, S, _ = x.shape
    d_model = params["in_w"].shape[1]
    depth = d_model // num_heads
    net = x @ params["in_w"] + params["in_b"]
    net = net * (d_model ** 0.5)
    for lp in params["layers"]:
        q = net @ lp["wq_w"] + lp["wq_b"]
        k = net @ lp["wk_w"] + lp["wk_b"]
        v = net @ lp["wv_w"] + lp["wv_b"]

        def split(t):
            return t.reshape(B, S, num_heads, depth).transpose(0, 2, 1, 3)

        qh, kh, vh = split(q), split(k), split(v)
        logits = jnp.einsum("bhqd,bhkd->bhqk", qh, kh) / math.sqrt(depth)
        if mask is not None:
            logits = logits + mask * -1000000000.0
        w = jax.nn.softmax(logits, axis=-1)
        attn = jnp.einsum("bhqk,bhkd->bhqd", w, vh)
        attn = attn.transpose(0, 2, 1, 3).reshape(B, S, d_model)
        attn = attn @ lp["wo_w"] + lp["wo_b"]
        out1 = _ln_ref(net + attn, lp["ln1_g"], lp["ln1_b"])
        h = jnp.maximum(out1 @ lp["ff1_w"] + lp["ff1_b"], 0.0)
        ffn_out = h @ lp["ff2_w"] + lp["ff2_b"]
        net = _ln_ref(out1 + ffn_out, lp["ln2_g"], lp["ln2_b"])
    return net


# ----------------------------- test ----------------------------------------

if __name__ == "__main__":
    B, S = 2, 8
    d_x, d_model, num_heads, d_ff, num_layers = 16, 32, 4, 64, 2

    key = jax.random.PRNGKey(0)
    kp, kx, km = jax.random.split(key, 3)

    params = init_params(kp, d_x, d_model, num_heads, d_ff, num_layers)
    x = jax.random.normal(kx, (B, S, d_x), dtype=jnp.float32)
    # Padding-style additive mask, (B, 1, 1, S) as usual for torch broadcasting.
    mask = (jax.random.uniform(km, (B, 1, 1, S)) > 0.7).astype(jnp.float32)

    # bf16 MXU operands (f32 accumulation) => looser tolerance vs f32 reference.
    out = jax.block_until_ready(
        transformer_encoder(params, x, mask=mask, num_heads=num_heads))
    ref = reference_encoder(params, x, mask=mask, num_heads=num_heads)
    assert out.shape == (B, S, d_model)
    assert jnp.allclose(out, ref, atol=1e-1, rtol=1e-1), (
        "mismatch vs reference (masked): max abs err = "
        f"{float(jnp.max(jnp.abs(out - ref)))}")

    # No-mask path (exercises the conditional in_specs / kernel signature).
    out2 = jax.block_until_ready(
        transformer_encoder(params, x, mask=None, num_heads=num_heads))
    ref2 = reference_encoder(params, x, mask=None, num_heads=num_heads)
    assert jnp.allclose(out2, ref2, atol=1e-1, rtol=1e-1), (
        "mismatch vs reference (plain): max abs err = "
        f"{float(jnp.max(jnp.abs(out2 - ref2)))}")

    print("KERNEL_OK")
</pallas_src>

<mosaic_0001>
module attributes {stable_mosaic.version = 11 : i64} {
  func.func @_k(%arg0: i32, %arg1: memref<8x128xf32, #tpu.memory_space<vmem>>, %arg2: memref<1x128xf32, #tpu.memory_space<vmem>>, %arg3: memref<8x128xf32, #tpu.memory_space<vmem>>) attributes {dimension_semantics = [#tpu.dimension_semantics<arbitrary>], iteration_bounds = array<i64: 2>, scalar_prefetch = 0 : i64, scratch_operands = 0 : i64, tpu.core_type = #tpu.core_type<tc>, window_params = [{transform_indices = @transform_0, window_bounds = array<i64: 8, 128>}, {pipeline_mode = #tpu.pipeline_mode<synchronous>, transform_indices = @transform_1, window_bounds = array<i64: 1, 128>}, {transform_indices = @transform_2, window_bounds = array<i64: 8, 128>}]} {
    %c0 = arith.constant 0 : index
    %c0_0 = arith.constant 0 : index
    %0 = vector.load %arg1[%c0, %c0_0] : memref<8x128xf32, #tpu.memory_space<vmem>>, vector<8x128xf32>
    %c0_1 = arith.constant 0 : index
    %c0_2 = arith.constant 0 : index
    %1 = vector.load %arg2[%c0_1, %c0_2] : memref<1x128xf32, #tpu.memory_space<vmem>>, vector<1x128xf32>
    %2 = vector.broadcast %1 : vector<1x128xf32> to vector<8x128xf32>
    %3 = arith.addf %0, %2 : vector<8x128xf32>
    %c0_3 = arith.constant 0 : index
    %c0_4 = arith.constant 0 : index
    %4 = vector.load %arg3[%c0_3, %c0_4] : memref<8x128xf32, #tpu.memory_space<vmem>>, vector<8x128xf32>
    tpu.vector_store %arg3[%c0_3, %c0_4], %3 {strides = array<i32>} : memref<8x128xf32, #tpu.memory_space<vmem>>, vector<8x128xf32>,
    return
  }
  func.func @transform_0(%arg0: i32) -> (i32, i32) {
    %c0_i32 = arith.constant 0 : i32
    %c0_i32_0 = arith.constant 0 : i32
    return %arg0, %c0_i32 : i32, i32
  }
  func.func @transform_1(%arg0: i32) -> (i32, i32) {
    %c0_i32 = arith.constant 0 : i32
    %c0_i32_0 = arith.constant 0 : i32
    %c0_i32_1 = arith.constant 0 : i32
    return %c0_i32, %c0_i32_0 : i32, i32
  }
  func.func @transform_2(%arg0: i32) -> (i32, i32) {
    %c0_i32 = arith.constant 0 : i32
    %c0_i32_0 = arith.constant 0 : i32
    return %arg0, %c0_i32 : i32, i32
  }
}

module attributes {stable_mosaic.version = 11 : i64} {
  func.func @_dense_kernel(%arg0: i32, %arg1: memref<8x16xf32, #tpu.memory_space<vmem>>, %arg2: memref<16x32xbf16, #tpu.memory_space<vmem>>, %arg3: memref<1x32xf32, #tpu.memory_space<vmem>>, %arg4: memref<8x32xf32, #tpu.memory_space<vmem>>) attributes {dimension_semantics = [#tpu.dimension_semantics<parallel>], iteration_bounds = array<i64: 2>, scalar_prefetch = 0 : i64, scratch_operands = 0 : i64, tpu.core_type = #tpu.core_type<tc>, window_params = [{transform_indices = @transform_0, window_bounds = array<i64: 8, 16>}, {pipeline_mode = #tpu.pipeline_mode<synchronous>, transform_indices = @transform_1, window_bounds = array<i64: 16, 32>}, {pipeline_mode = #tpu.pipeline_mode<synchronous>, transform_indices = @transform_2, window_bounds = array<i64: 1, 32>}, {transform_indices = @transform_3, window_bounds = array<i64: 8, 32>}]} {
    %c0 = arith.constant 0 : index
    %c0_0 = arith.constant 0 : index
    %0 = vector.load %arg1[%c0, %c0_0] : memref<8x16xf32, #tpu.memory_space<vmem>>, vector<8x16xf32>
    %1 = arith.truncf %0 : vector<8x16xf32> to vector<8x16xbf16>
    %c0_1 = arith.constant 0 : index
    %c0_2 = arith.constant 0 : index
    %2 = vector.load %arg2[%c0_1, %c0_2] : memref<16x32xbf16, #tpu.memory_space<vmem>>, vector<16x32xbf16>
    %cst = arith.constant dense<0.000000e+00> : vector<8x32xf32>
    %3 = tpu.matmul %1, %2, %cst {dimension_numbers = #tpu.dot_dimension_numbers<[1], [0], [0], [1], [0, 0, 1, 1], [], []>} : vector<8x16xbf16>, vector<16x32xbf16>, vector<8x32xf32> -> vector<8x32xf32>
    %c0_3 = arith.constant 0 : index
    %c0_4 = arith.constant 0 : index
    %4 = vector.load %arg3[%c0_3, %c0_4] : memref<1x32xf32, #tpu.memory_space<vmem>>, vector<1x32xf32>
    %5 = vector.broadcast %4 : vector<1x32xf32> to vector<8x32xf32>
    %6 = arith.addf %3, %5 : vector<8x32xf32>
    %cst_5 = arith.constant 5.65685415 : f32
    %7 = vector.broadcast %cst_5 : f32 to vector<8x32xf32>
    %8 = arith.mulf %6, %7 : vector<8x32xf32>
    %c0_6 = arith.constant 0 : index
    %c0_7 = arith.constant 0 : index
    %9 = vector.load %arg4[%c0_6, %c0_7] : memref<8x32xf32, #tpu.memory_space<vmem>>, vector<8x32xf32>
    tpu.vector_store %arg4[%c0_6, %c0_7], %8 {strides = array<i32>} : memref<8x32xf32, #tpu.memory_space<vmem>>, vector<8x32xf32>,
    return
  }
  func.func @transform_0(%arg0: i32) -> (i32, i32) {
    %c0_i32 = arith.constant 0 : i32
    %c0_i32_0 = arith.constant 0 : i32
    return %arg0, %c0_i32 : i32, i32
  }
  func.func @transform_1(%arg0: i32) -> (i32, i32) {
    %c0_i32 = arith.constant 0 : i32
    %c0_i32_0 = arith.constant 0 : i32
    %c0_i32_1 = arith.constant 0 : i32
    return %c0_i32, %c0_i32_0 : i32, i32
  }
  func.func @transform_2(%arg0: i32) -> (i32, i32) {
    %c0_i32 = arith.constant 0 : i32
    %c0_i32_0 = arith.constant 0 : i32
    %c0_i32_1 = arith.constant 0 : i32
    return %c0_i32, %c0_i32_0 : i32, i32
  }
  func.func @transform_3(%arg0: i32) -> (i32, i32) {
    %c0_i32 = arith.constant 0 : i32
    %c0_i32_0 = arith.constant 0 : i32
    return %arg0, %c0_i32 : i32, i32
  }
}

</mosaic_0001>

<llo_original>
// kernel: tpu_custom_call.1
$region0: #{tpu_custom_call.1}
  #allocation0 [shape = 'u32[]', space=smem, size = 0x4, offset = 0x4, fixed_abs, tag = 'smem constant byte address 0x4 - core index']
  #allocation1 [shape = 'u32[72,128]{1,0:T(1,128)}', space=vmem, size = 0x9000, scoped, tag = 'internal scratch']
  %s0 = inlined_call_operand.hbm [shape: f32[16,128], index: 0, kind: input, shape index: {}]
  %s1 = inlined_call_operand.hbm [shape: f32[1,128], index: 1, kind: input, shape index: {}]
  %s2 = inlined_call_operand.hbm [shape: f32[16,128], index: 2, kind: output, shape index: {}]
  %s3 = sld [smem:[#allocation0]]
  $region49: #{tpu_custom_call.1} parent=0
    _
  %s5 = ssub.s32 1, %s3
  %s6 = scalar_select 0, %s5, %s3
  $region1: #{tpu_custom_call.1} parent=0
    #allocation2 [shape = 'u8[8192]{0}', space=vmem, size = 0x2000, scoped, tag = 'input window, operand 0']
    #allocation3 [shape = 's32[2]{0}', space=sflag, size = 0x8, scoped, tag = 'scoped memory for tpu_custom_call.1']
    #allocation4 [shape = 's32[2]{0}', space=sflag, size = 0x8, scoped, tag = 'scoped memory for tpu_custom_call.1']
    #allocation5 [shape = 'u8[512]{0}', space=vmem, size = 0x400, scoped, tag = 'input window, operand 1, single buffered']
    #allocation6 [shape = 's32[1]{0}', space=sflag, size = 0x4, scoped, tag = 'scoped memory for tpu_custom_call.1']
    #allocation7 [shape = 'u8[8192]{0}', space=vmem, size = 0x2000, scoped, tag = 'output window, operand 0']
    %7 = vsyncpa [#allocation3], 0
    %s8 = scalar_lea.sflag [#allocation3], 1
    %9 = vsyncpa %s8, 0
    %10 = vsyncpa [#allocation6], 0
    %11 = vsyncpa [#allocation4], 0
    %s12 = scalar_lea.sflag [#allocation4], 1
    %13 = vsyncpa %s12, 0
    loop: start=0, step=1, limit=4
    $region2: #{tpu_custom_call.1} parent=1 // loop_pre_header
      _
    $region3: #{tpu_custom_call.1} parent=1 // loop_header
      %s15 = sphi 0, %s19
      %p16 = scmp.ge.s32.totalorder %s15, 4
      %s25 = sphi 0, %s27
      %s28 = sphi 0, %s25
      %s29 = sphi 0, %s28
      %s45 = sphi 0, %s29
      %s49 = sphi 0, %s49
      %s51 = sphi 0, %s49
      %s52 = sphi 0, %s51
      %s66 = sphi 0, %s52
      %s72 = sphi 0, %s74
      %s75 = sphi 0, %s72
      %s76 = sphi 0, %s75
      %s92 = sphi 0, %s76
    $region4: #{tpu_custom_call.1} parent=1 // loop_header_branch
      %18 = sbr.rel (%p16) target = $region8
    $region5: #{tpu_custom_call.1} parent=1 // loop_body
      %s20 = ssub.s32 %s15, 1
      %s21 = ssub.s32 %s15, 2
      %s22 = sadd.s32 %s15, 1
      %s23 = ssub.s32 %s15, %s22
      %p24 = scmp.eq.s32.totalorder %s23, 0
      %s26 = sadd.s32 %s25, 1
      %s27 = scalar_select %p24, %s25, %s26
      %p30 = pneg %p24
      %p31 = scmp.eq.s32.totalorder %s15, 1
      %p32 = por %p30, %p31
      %p33 = scmp.ne.s32.totalorder %s25, %s28
      %p34 = scmp.eq.s32.totalorder %s15, 0
      %p35 = por %p33, %p34
      %p36 = scmp.ne.s32.totalorder %s25, %s28
      %p37 = scmp.eq.s32.totalorder %s20, 1
      %p38 = por %p36, %p37
      %p39 = scmp.ne.s32.totalorder %s28, %s29
      %p40 = scmp.eq.s32.totalorder %s20, 0
      %p41 = por %p39, %p40
      %p42 = scmp.ne.s32.totalorder %s28, %s29
      %p43 = scmp.eq.s32.totalorder %s21, 1
      %p44 = por %p42, %p43
      %p46 = scmp.ne.s32.totalorder %s29, %s45
      %p47 = scmp.eq.s32.totalorder %s21, 0
      %p48 = por %p46, %p47
      %s50 = sadd.s32 %s49, 1
      %p53 = scmp.eq.s32.totalorder %s15, 1
      %p54 = scmp.ne.s32.totalorder %s49, %s51
      %p55 = scmp.eq.s32.totalorder %s15, 0
      %p56 = por %p54, %p55
      %p57 = scmp.ne.s32.totalorder %s49, %s51
      %p58 = scmp.eq.s32.totalorder %s20, 1
      %p59 = por %p57, %p58
      %p60 = scmp.ne.s32.totalorder %s51, %s52
      %p61 = scmp.eq.s32.totalorder %s20, 0
      %p62 = por %p60, %p61
      %p63 = scmp.ne.s32.totalorder %s51, %s52
      %p64 = scmp.eq.s32.totalorder %s21, 1
      %p65 = por %p63, %p64
      %p67 = scmp.ne.s32.totalorder %s52, %s66
      %p68 = scmp.eq.s32.totalorder %s21, 0
      %p69 = por %p67, %p68
      %s70 = ssub.s32 %s15, %s22
      %p71 = scmp.eq.s32.totalorder %s70, 0
      %s73 = sadd.s32 %s72, 1
      %s74 = scalar_select %p71, %s72, %s73
      %p77 = pneg %p71
      %p78 = scmp.eq.s32.totalorder %s15, 1
      %p79 = por %p77, %p78
      %p80 = scmp.ne.s32.totalorder %s72, %s75
      %p81 = scmp.eq.s32.totalorder %s15, 0
      %p82 = por %p80, %p81
      %p83 = scmp.ne.s32.totalorder %s72, %s75
      %p84 = scmp.eq.s32.totalorder %s20, 1
      %p85 = por %p83, %p84
      %p86 = scmp.ne.s32.totalorder %s75, %s76
      %p87 = scmp.eq.s32.totalorder %s20, 0
      %p88 = por %p86, %p87
      %p89 = scmp.ne.s32.totalorder %s75, %s76
      %p90 = scmp.eq.s32.totalorder %s21, 1
      %p91 = por %p89, %p90
      %p93 = scmp.ne.s32.totalorder %s76, %s92
      %p94 = scmp.eq.s32.totalorder %s21, 0
      %p95 = por %p93, %p94
      %p96 = scmp.le.s32.totalorder 1, %s15
      %p97 = scmp.lt.s32.totalorder %s15, 3
      %p98 = pnand %p96, %p97
      %p99 = pneg %p98
      // Predicated region
      $region9: #{tpu_custom_call.1} parent=5 // pred_check
        _
      $region10: #{tpu_custom_call.1} parent=5 // pred_check_branch
        %101 = sbr.rel (%p98) target = $region12
      $region11: #{tpu_custom_call.1} parent=5 // pred_region
        %s102 = ssub.s32 %s15, 1
        // Predicated region
        $region13: #{tpu_custom_call.1} parent=11 // pred_check
          %p103 = pneg %p62
        $region14: #{tpu_custom_call.1} parent=11 // pred_check_branch
          %105 = sbr.rel (%p103) target = $region16
        $region15: #{tpu_custom_call.1} parent=11 // pred_region
          %107 = vsyncadd [#allocation6], 0
          %s109 = sshll.u32 %s1, 4
          %s110 = int_to_ptr.hbm [resolvable:$true] %s109
          %s111 = sshll.u32 [#allocation5], 4
          %s112 = int_to_ptr.vmem [resolvable:$true] %s111
          %114 = dma.hbm_to_vmem [thread:$0]  %s110, 16, %s112, [#allocation6]
        $region16: #{tpu_custom_call.1} parent=11 // pred_fallthru
          _
      $region12: #{tpu_custom_call.1} parent=5 // pred_fallthru
        _
      %p115 = scmp.lt.s32.totalorder %s15, 2
      // Predicated region
      $region17: #{tpu_custom_call.1} parent=5 // pred_check
        %p116 = pneg %p115
      $region18: #{tpu_custom_call.1} parent=5 // pred_check_branch
        %118 = sbr.rel (%p116) target = $region20
      $region19: #{tpu_custom_call.1} parent=5 // pred_region
        // Predicated region
        $region21: #{tpu_custom_call.1} parent=19 // pred_check
          %p119 = pneg %p35
        $region22: #{tpu_custom_call.1} parent=19 // pred_check_branch
          %121 = sbr.rel (%p119) target = $region24
        $region23: #{tpu_custom_call.1} parent=19 // pred_region
          %s122 = sand.u32 %s25, 1
          %s123 = scalar_lea.sflag [#allocation3], %s122
          %s124 = sand.u32 %s25, 1
          %s125 = smul.addr %s124, 8
          %s126 = scalar_lea.vmem [#allocation2], %s125
          %128 = vsyncadd %s123, 0
          %s129 = smul.addr %s15, 8
          %s130 = scalar_lea.hbm %s0, %s129
          %s132 = sshll.u32 %s130, 4
          %s133 = int_to_ptr.hbm [resolvable:$true] %s132
          %s134 = sshll.u32 %s126, 4
          %s135 = int_to_ptr.vmem [resolvable:$true] %s134
          %137 = dma.hbm_to_vmem [thread:$0]  %s133, 128, %s135, %s123
        $region24: #{tpu_custom_call.1} parent=19 // pred_fallthru
          _
      $region20: #{tpu_custom_call.1} parent=5 // pred_fallthru
        _
      %p138 = scmp.le.s32.totalorder 1, %s15
      %p139 = scmp.lt.s32.totalorder %s15, 3
      %p140 = pnand %p138, %p139
      %p141 = pneg %p140
      // Predicated region
      $region25: #{tpu_custom_call.1} parent=5 // pred_check
        _
      $region26: #{tpu_custom_call.1} parent=5 // pred_check_branch
        %143 = sbr.rel (%p140) target = $region28
      $region27: #{tpu_custom_call.1} parent=5 // pred_region
        %s144 = ssub.s32 %s15, 1
        %s145 = sand.u32 %s28, 1
        %s146 = scalar_lea.sflag [#allocation3], %s145
        %s147 = sand.u32 %s28, 1
        %s148 = smul.addr %s147, 8
        %s149 = scalar_lea.vmem [#allocation2], %s148
        // Predicated region
        $region29: #{tpu_custom_call.1} parent=27 // pred_check
          %p150 = pneg %p41
        $region30: #{tpu_custom_call.1} parent=27 // pred_check_branch
          %152 = sbr.rel (%p150) target = $region32
        $region31: #{tpu_custom_call.1} parent=27 // pred_region
          %154 = dma.done %s146, 128
        $region32: #{tpu_custom_call.1} parent=27 // pred_fallthru
          _
        // Predicated region
        $region33: #{tpu_custom_call.1} parent=27 // pred_check
          %p155 = pneg %p62
        $region34: #{tpu_custom_call.1} parent=27 // pred_check_branch
          %157 = sbr.rel (%p155) target = $region36
        $region35: #{tpu_custom_call.1} parent=27 // pred_region
          %159 = dma.done [#allocation6], 16
        $region36: #{tpu_custom_call.1} parent=27 // pred_fallthru
          _
        %s160 = sand.u32 %s28, 1
        %s161 = scalar_lea.sflag [#allocation3], %s160
        %s162 = sand.u32 %s28, 1
        %s163 = smul.addr %s162, 8
        %s164 = scalar_lea.vmem [#allocation2], %s163
        %p165 = pneg %p41
        %p166 = pneg %p38
        %p167 = pneg %p62
        %p168 = pneg %p59
        %p169 = pneg %p88
        %p170 = pneg %p85
        %s171 = sand.u32 %s75, 1
        %s172 = scalar_lea.sflag [#allocation4], %s171
        %s173 = sand.u32 %s75, 1
        %s174 = smul.addr %s173, 8
        %s175 = scalar_lea.vmem [#allocation7], %s174
        %v176 = vld [vmem:[%s149] sm:$0xff]
        %v177 = vld [vmem:[#allocation5] sm:$0x1]
        %v179 = vperm.slane %v177, 0
        %v181 = vadd.f32 %v176, %v179
        %182 = vst [vmem:[%s175] sm:$0xff] %v181
        %s183 = sand.u32 %s75, 1
        %s184 = scalar_lea.sflag [#allocation4], %s183
        %s185 = sand.u32 %s75, 1
        %s186 = smul.addr %s185, 8
        %s187 = scalar_lea.vmem [#allocation7], %s186
        // Predicated region
        $region37: #{tpu_custom_call.1} parent=27 // pred_check
          %p188 = pneg %p85
        $region38: #{tpu_custom_call.1} parent=27 // pred_check_branch
          %190 = sbr.rel (%p188) target = $region40
        $region39: #{tpu_custom_call.1} parent=27 // pred_region
          %192 = vsyncadd %s184, 0
          %s193 = smul.addr %s20, 8
          %s194 = scalar_lea.hbm %s2, %s193
          %s196 = sshll.u32 %s187, 4
          %s197 = int_to_ptr.vmem [resolvable:$true] %s196
          %s198 = sshll.u32 %s194, 4
          %s199 = int_to_ptr.hbm [resolvable:$true] %s198
          %201 = dma.vmem_to_hbm [thread:$0]  %s197, 128, %s199, %s184
        $region40: #{tpu_custom_call.1} parent=27 // pred_fallthru
          _
      $region28: #{tpu_custom_call.1} parent=5 // pred_fallthru
        _
      %p202 = scmp.le.s32.totalorder 2, %s15
      // Predicated region
      $region41: #{tpu_custom_call.1} parent=5 // pred_check
        %p203 = pneg %p202
      $region42: #{tpu_custom_call.1} parent=5 // pred_check_branch
        %205 = sbr.rel (%p203) target = $region44
      $region43: #{tpu_custom_call.1} parent=5 // pred_region
        %s206 = ssub.s32 %s15, 2
        // Predicated region
        $region45: #{tpu_custom_call.1} parent=43 // pred_check
          %p207 = pneg %p91
        $region46: #{tpu_custom_call.1} parent=43 // pred_check_branch
          %209 = sbr.rel (%p207) target = $region48
        $region47: #{tpu_custom_call.1} parent=43 // pred_region
          %s210 = sand.u32 %s76, 1
          %s211 = scalar_lea.sflag [#allocation4], %s210
          %s212 = sand.u32 %s76, 1
          %s213 = smul.addr %s212, 8
          %s214 = scalar_lea.vmem [#allocation7], %s213
          %216 = dma.done %s211, 128
        $region48: #{tpu_custom_call.1} parent=43 // pred_fallthru
          _
      $region44: #{tpu_custom_call.1} parent=5 // pred_fallthru
        _
    $region6: #{tpu_custom_call.1} parent=1 // loop_footer
      %s19 = sadd.s32 1, %s15
    $region7: #{tpu_custom_call.1} parent=1 // loop_footer_branch
      %14 = sbr.rel target = $region3
    $region8: #{tpu_custom_call.1} parent=1 // loop_exit
      _
    %217 = vsyncpa [#allocation3], 1
    %s218 = scalar_lea.sflag [#allocation3], 1
    %219 = vsyncpa %s218, 1
    %220 = vsyncpa [#allocation6], 1
    %221 = vsyncpa [#allocation4], 1
    %s222 = scalar_lea.sflag [#allocation4], 1
    %223 = vsyncpa %s222, 1

// kernel: tpu_custom_call.1
$region0: #{tpu_custom_call.1}
  #allocation0 [shape = 'u32[]', space=smem, size = 0x4, offset = 0x4, fixed_abs, tag = 'smem constant byte address 0x4 - core index']
  #allocation1 [shape = 'u32[72,128]{1,0:T(1,128)}', space=vmem, size = 0x9000, scoped, tag = 'internal scratch']
  %s0 = inlined_call_operand.hbm [shape: f32[16,16], index: 0, kind: input, shape index: {}]
  %s1 = inlined_call_operand.hbm [shape: bf16[16,32], index: 1, kind: input, shape index: {}]
  %s2 = inlined_call_operand.vmem [shape: f32[1,32], index: 2, kind: input, shape index: {}]
  %s3 = inlined_call_operand.hbm [shape: f32[16,32], index: 3, kind: output, shape index: {}]
  %s4 = sld [smem:[#allocation0]]
  $region53: #{tpu_custom_call.1} parent=0
    _
  %s6 = ssub.s32 1, %s4
  %s7 = scalar_select 0, %s6, %s4
  $region1: #{tpu_custom_call.1} parent=0
    #allocation2 [shape = 'u8[8192]{0}', space=vmem, size = 0x2000, scoped, tag = 'input window, operand 0']
    #allocation3 [shape = 's32[2]{0}', space=sflag, size = 0x8, scoped, tag = 'scoped memory for tpu_custom_call.1']
    #allocation4 [shape = 's32[2]{0}', space=sflag, size = 0x8, scoped, tag = 'scoped memory for tpu_custom_call.1']
    #allocation5 [shape = 'u8[4096]{0}', space=vmem, size = 0x1000, scoped, tag = 'input window, operand 1, single buffered']
    #allocation6 [shape = 's32[1]{0}', space=sflag, size = 0x4, scoped, tag = 'scoped memory for tpu_custom_call.1']
    #allocation7 [shape = 'u8[8192]{0}', space=vmem, size = 0x2000, scoped, tag = 'output window, operand 0']
    %8 = vsyncpa [#allocation3], 0
    %s9 = scalar_lea.sflag [#allocation3], 1
    %10 = vsyncpa %s9, 0
    %11 = vsyncpa [#allocation6], 0
    %12 = vsyncpa [#allocation4], 0
    %s13 = scalar_lea.sflag [#allocation4], 1
    %14 = vsyncpa %s13, 0
    loop: start=0, step=1, limit=4
    $region2: #{tpu_custom_call.1} parent=1 // loop_pre_header
      _
    $region3: #{tpu_custom_call.1} parent=1 // loop_header
      %s16 = sphi 0, %s20
      %p17 = scmp.ge.s32.totalorder %s16, 4
      %s26 = sphi 0, %s28
      %s29 = sphi 0, %s26
      %s30 = sphi 0, %s29
      %s46 = sphi 0, %s30
      %s50 = sphi 0, %s50
      %s52 = sphi 0, %s50
      %s53 = sphi 0, %s52
      %s67 = sphi 0, %s53
      %s71 = sphi 0, %s71
      %s73 = sphi 0, %s71
      %s74 = sphi 0, %s73
      %s88 = sphi 0, %s74
      %s94 = sphi 0, %s96
      %s97 = sphi 0, %s94
      %s98 = sphi 0, %s97
      %s114 = sphi 0, %s98
    $region4: #{tpu_custom_call.1} parent=1 // loop_header_branch
      %19 = sbr.rel (%p17) target = $region8
    $region5: #{tpu_custom_call.1} parent=1 // loop_body
      %s21 = ssub.s32 %s16, 1
      %s22 = ssub.s32 %s16, 2
      %s23 = sadd.s32 %s16, 1
      %s24 = ssub.s32 %s16, %s23
      %p25 = scmp.eq.s32.totalorder %s24, 0
      %s27 = sadd.s32 %s26, 1
      %s28 = scalar_select %p25, %s26, %s27
      %p31 = pneg %p25
      %p32 = scmp.eq.s32.totalorder %s16, 1
      %p33 = por %p31, %p32
      %p34 = scmp.ne.s32.totalorder %s26, %s29
      %p35 = scmp.eq.s32.totalorder %s16, 0
      %p36 = por %p34, %p35
      %p37 = scmp.ne.s32.totalorder %s26, %s29
      %p38 = scmp.eq.s32.totalorder %s21, 1
      %p39 = por %p37, %p38
      %p40 = scmp.ne.s32.totalorder %s29, %s30
      %p41 = scmp.eq.s32.totalorder %s21, 0
      %p42 = por %p40, %p41
      %p43 = scmp.ne.s32.totalorder %s29, %s30
      %p44 = scmp.eq.s32.totalorder %s22, 1
      %p45 = por %p43, %p44
      %p47 = scmp.ne.s32.totalorder %s30, %s46
      %p48 = scmp.eq.s32.totalorder %s22, 0
      %p49 = por %p47, %p48
      %s51 = sadd.s32 %s50, 1
      %p54 = scmp.eq.s32.totalorder %s16, 1
      %p55 = scmp.ne.s32.totalorder %s50, %s52
      %p56 = scmp.eq.s32.totalorder %s16, 0
      %p57 = por %p55, %p56
      %p58 = scmp.ne.s32.totalorder %s50, %s52
      %p59 = scmp.eq.s32.totalorder %s21, 1
      %p60 = por %p58, %p59
      %p61 = scmp.ne.s32.totalorder %s52, %s53
      %p62 = scmp.eq.s32.totalorder %s21, 0
      %p63 = por %p61, %p62
      %p64 = scmp.ne.s32.totalorder %s52, %s53
      %p65 = scmp.eq.s32.totalorder %s22, 1
      %p66 = por %p64, %p65
      %p68 = scmp.ne.s32.totalorder %s53, %s67
      %p69 = scmp.eq.s32.totalorder %s22, 0
      %p70 = por %p68, %p69
      %s72 = sadd.s32 %s71, 1
      %p75 = scmp.eq.s32.totalorder %s16, 1
      %p76 = scmp.ne.s32.totalorder %s71, %s73
      %p77 = scmp.eq.s32.totalorder %s16, 0
      %p78 = por %p76, %p77
      %p79 = scmp.ne.s32.totalorder %s71, %s73
      %p80 = scmp.eq.s32.totalorder %s21, 1
      %p81 = por %p79, %p80
      %p82 = scmp.ne.s32.totalorder %s73, %s74
      %p83 = scmp.eq.s32.totalorder %s21, 0
      %p84 = por %p82, %p83
      %p85 = scmp.ne.s32.totalorder %s73, %s74
      %p86 = scmp.eq.s32.totalorder %s22, 1
      %p87 = por %p85, %p86
      %p89 = scmp.ne.s32.totalorder %s74, %s88
      %p90 = scmp.eq.s32.totalorder %s22, 0
      %p91 = por %p89, %p90
      %s92 = ssub.s32 %s16, %s23
      %p93 = scmp.eq.s32.totalorder %s92, 0
      %s95 = sadd.s32 %s94, 1
      %s96 = scalar_select %p93, %s94, %s95
      %p99 = pneg %p93
      %p100 = scmp.eq.s32.totalorder %s16, 1
      %p101 = por %p99, %p100
      %p102 = scmp.ne.s32.totalorder %s94, %s97
      %p103 = scmp.eq.s32.totalorder %s16, 0
      %p104 = por %p102, %p103
      %p105 = scmp.ne.s32.totalorder %s94, %s97
      %p106 = scmp.eq.s32.totalorder %s21, 1
      %p107 = por %p105, %p106
      %p108 = scmp.ne.s32.totalorder %s97, %s98
      %p109 = scmp.eq.s32.totalorder %s21, 0
      %p110 = por %p108, %p109
      %p111 = scmp.ne.s32.totalorder %s97, %s98
      %p112 = scmp.eq.s32.totalorder %s22, 1
      %p113 = por %p111, %p112
      %p115 = scmp.ne.s32.totalorder %s98, %s114
      %p116 = scmp.eq.s32.totalorder %s22, 0
      %p117 = por %p115, %p116
      %p118 = scmp.le.s32.totalorder 1, %s16
      %p119 = scmp.lt.s32.totalorder %s16, 3
      %p120 = pnand %p118, %p119
      %p121 = pneg %p120
      // Predicated region
      $region9: #{tpu_custom_call.1} parent=5 // pred_check
        _
      $region10: #{tpu_custom_call.1} parent=5 // pred_check_branch
        %123 = sbr.rel (%p120) target = $region12
      $region11: #{tpu_custom_call.1} parent=5 // pred_region
        %s124 = ssub.s32 %s16, 1
        // Predicated region
        $region13: #{tpu_custom_call.1} parent=11 // pred_check
          %p125 = pneg %p63
        $region14: #{tpu_custom_call.1} parent=11 // pred_check_branch
          %127 = sbr.rel (%p125) target = $region16
        $region15: #{tpu_custom_call.1} parent=11 // pred_region
          %129 = vsyncadd [#allocation6], 0
          %s130 = sshll.u32 %s1, 4
          %s131 = int_to_ptr.hbm [resolvable:$true] %s130
          %s132 = sshll.u32 [#allocation5], 4
          %s133 = int_to_ptr.vmem [resolvable:$true] %s132
          %138 = dma.hbm_to_vmem [thread:$0]  %s131, 128, %s133, [#allocation6], 64, 64, 4
        $region16: #{tpu_custom_call.1} parent=11 // pred_fallthru
          _
        // Predicated region
        $region17: #{tpu_custom_call.1} parent=11 // pred_check
          %p139 = pneg %p84
        $region18: #{tpu_custom_call.1} parent=11 // pred_check_branch
          %141 = sbr.rel (%p139) target = $region20
        $region19: #{tpu_custom_call.1} parent=11 // pred_region
          _
        $region20: #{tpu_custom_call.1} parent=11 // pred_fallthru
          _
      $region12: #{tpu_custom_call.1} parent=5 // pred_fallthru
        _
      %p142 = scmp.lt.s32.totalorder %s16, 2
      // Predicated region
      $region21: #{tpu_custom_call.1} parent=5 // pred_check
        %p143 = pneg %p142
      $region22: #{tpu_custom_call.1} parent=5 // pred_check_branch
        %145 = sbr.rel (%p143) target = $region24
      $region23: #{tpu_custom_call.1} parent=5 // pred_region
        // Predicated region
        $region25: #{tpu_custom_call.1} parent=23 // pred_check
          %p146 = pneg %p36
        $region26: #{tpu_custom_call.1} parent=23 // pred_check_branch
          %148 = sbr.rel (%p146) target = $region28
        $region27: #{tpu_custom_call.1} parent=23 // pred_region
          %s149 = sand.u32 %s26, 1
          %s150 = scalar_lea.sflag [#allocation3], %s149
          %s151 = sand.u32 %s26, 1
          %s152 = smul.addr %s151, 8
          %s153 = scalar_lea.vmem [#allocation2], %s152
          %155 = vsyncadd %s150, 0
          %s156 = smul.addr %s16, 8
          %s157 = scalar_lea.hbm %s0, %s156
          %s159 = sshll.u32 %s157, 4
          %s160 = int_to_ptr.hbm [resolvable:$true] %s159
          %s161 = sshll.u32 %s153, 4
          %s162 = int_to_ptr.vmem [resolvable:$true] %s161
          %164 = dma.hbm_to_vmem [thread:$0]  %s160, 128, %s162, %s150
        $region28: #{tpu_custom_call.1} parent=23 // pred_fallthru
          _
      $region24: #{tpu_custom_call.1} parent=5 // pred_fallthru
        _
      %p165 = scmp.le.s32.totalorder 1, %s16
      %p166 = scmp.lt.s32.totalorder %s16, 3
      %p167 = pnand %p165, %p166
      %p168 = pneg %p167
      // Predicated region
      $region29: #{tpu_custom_call.1} parent=5 // pred_check
        _
      $region30: #{tpu_custom_call.1} parent=5 // pred_check_branch
        %170 = sbr.rel (%p167) target = $region32
      $region31: #{tpu_custom_call.1} parent=5 // pred_region
        %s171 = ssub.s32 %s16, 1
        %s172 = sand.u32 %s29, 1
        %s173 = scalar_lea.sflag [#allocation3], %s172
        %s174 = sand.u32 %s29, 1
        %s175 = smul.addr %s174, 8
        %s176 = scalar_lea.vmem [#allocation2], %s175
        // Predicated region
        $region33: #{tpu_custom_call.1} parent=31 // pred_check
          %p177 = pneg %p42
        $region34: #{tpu_custom_call.1} parent=31 // pred_check_branch
          %179 = sbr.rel (%p177) target = $region36
        $region35: #{tpu_custom_call.1} parent=31 // pred_region
          %181 = dma.done %s173, 128
        $region36: #{tpu_custom_call.1} parent=31 // pred_fallthru
          _
        // Predicated region
        $region37: #{tpu_custom_call.1} parent=31 // pred_check
          %p182 = pneg %p63
        $region38: #{tpu_custom_call.1} parent=31 // pred_check_branch
          %184 = sbr.rel (%p182) target = $region40
        $region39: #{tpu_custom_call.1} parent=31 // pred_region
          %186 = dma.done [#allocation6], 128
        $region40: #{tpu_custom_call.1} parent=31 // pred_fallthru
          _
        %s187 = sand.u32 %s29, 1
        %s188 = scalar_lea.sflag [#allocation3], %s187
        %s189 = sand.u32 %s29, 1
        %s190 = smul.addr %s189, 8
        %s191 = scalar_lea.vmem [#allocation2], %s190
        %p192 = pneg %p42
        %p193 = pneg %p39
        %p194 = pneg %p63
        %p195 = pneg %p60
        %p196 = pneg %p84
        %p197 = pneg %p81
        %p198 = pneg %p110
        %p199 = pneg %p107
        %s200 = sand.u32 %s97, 1
        %s201 = scalar_lea.sflag [#allocation4], %s200
        %s202 = sand.u32 %s97, 1
        %s203 = smul.addr %s202, 8
        %s204 = scalar_lea.vmem [#allocation7], %s203
        %v206 = vld [vmem:[%s176] sm:$0xff]
        %v207 = vpack.c.bf16 %v206, %v206
        %v208 = vld [vmem:[#allocation5] sm:$0xf]
        %v209 = vld [vmem:[#allocation5 + $0x4] sm:$0xf]
        %v210 = vld [vmem:[%s2] sm:$0x1]
        %v212 = vperm.slane %v210, 0
        %v216 = vunpack.c.l.b16 %v208
        %v217 = vunpack.c.l.b16 %v209
        %v218 = vpack.c.b16 %v217, %v216
        %vm220 = vcmask 130048
        %v222 = vsel %vm220, %v207, 0
        %224 = vmatpush.bf16.msra.mxu0 0
        %225 = vmatpush.bf16.msra.mxu0 0
        %226 = vmatpush.bf16.msra.mxu0 0
        %227 = vmatpush.bf16.msra.mxu0 0
        %228 = vmatpush.bf16.msra.mxu0 0
        %229 = vmatpush.bf16.msra.mxu0 0
        %230 = vmatpush.bf16.msra.mxu0 0
        %231 = vmatpush.bf16.msra.mxu0 %v218
        %232 = vmatmul.bf16.gmra.mxu0 %v222
        %v233 = vpop.f32.mrf.mxu0
        %v234 = vadd.f32 %v212, %v233
        %v235 = vpop.f32.mrf.mxu0
        %236 = vdwg.mxu0
        %v237 = vmul.f32 %v234, 5.656854
        %vm238 = vcmask 261120
        %239 = vst.msk [vmem:[%s204] sm:$0xff] %vm238, %v237
        %s240 = sand.u32 %s97, 1
        %s241 = scalar_lea.sflag [#allocation4], %s240
        %s242 = sand.u32 %s97, 1
        %s243 = smul.addr %s242, 8
        %s244 = scalar_lea.vmem [#allocation7], %s243
        // Predicated region
        $region41: #{tpu_custom_call.1} parent=31 // pred_check
          %p245 = pneg %p107
        $region42: #{tpu_custom_call.1} parent=31 // pred_check_branch
          %247 = sbr.rel (%p245) target = $region44
        $region43: #{tpu_custom_call.1} parent=31 // pred_region
          %249 = vsyncadd %s241, 0
          %s250 = smul.addr %s21, 8
          %s251 = scalar_lea.hbm %s3, %s250
          %s253 = sshll.u32 %s244, 4
          %s254 = int_to_ptr.vmem [resolvable:$true] %s253
          %s255 = sshll.u32 %s251, 4
          %s256 = int_to_ptr.hbm [resolvable:$true] %s255
          %258 = dma.vmem_to_hbm [thread:$0]  %s254, 128, %s256, %s241
        $region44: #{tpu_custom_call.1} parent=31 // pred_fallthru
          _
      $region32: #{tpu_custom_call.1} parent=5 // pred_fallthru
        _
      %p259 = scmp.le.s32.totalorder 2, %s16
      // Predicated region
      $region45: #{tpu_custom_call.1} parent=5 // pred_check
        %p260 = pneg %p259
      $region46: #{tpu_custom_call.1} parent=5 // pred_check_branch
        %262 = sbr.rel (%p260) target = $region48
      $region47: #{tpu_custom_call.1} parent=5 // pred_region
        %s263 = ssub.s32 %s16, 2
        // Predicated region
        $region49: #{tpu_custom_call.1} parent=47 // pred_check
          %p264 = pneg %p113
        $region50: #{tpu_custom_call.1} parent=47 // pred_check_branch
          %266 = sbr.rel (%p264) target = $region52
        $region51: #{tpu_custom_call.1} parent=47 // pred_region
          %s267 = sand.u32 %s98, 1
          %s268 = scalar_lea.sflag [#allocation4], %s267
          %s269 = sand.u32 %s98, 1
          %s270 = smul.addr %s269, 8
          %s271 = scalar_lea.vmem [#allocation7], %s270
          %273 = dma.done %s268, 128
        $region52: #{tpu_custom_call.1} parent=47 // pred_fallthru
          _
      $region48: #{tpu_custom_call.1} parent=5 // pred_fallthru
        _
    $region6: #{tpu_custom_call.1} parent=1 // loop_footer
      %s20 = sadd.s32 1, %s16
    $region7: #{tpu_custom_call.1} parent=1 // loop_footer_branch
      %15 = sbr.rel target = $region3
    $region8: #{tpu_custom_call.1} parent=1 // loop_exit
      _
    %274 = vsyncpa [#allocation3], 1
    %s275 = scalar_lea.sflag [#allocation3], 1
    %276 = vsyncpa %s275, 1
    %277 = vsyncpa [#allocation6], 1
    %278 = vsyncpa [#allocation4], 1
    %s279 = scalar_lea.sflag [#allocation4], 1
    %280 = vsyncpa %s279, 1

</llo_original>
